<compile_context>
chip_gen: v5e
topology: v5e:2x2
jax: 0.10.0
libtpu: 0.0.40
codegen_flags: <defaults>
</compile_context>

<pallas_src>
import jax
import jax.numpy as jnp
from jax import lax
from jax.experimental import pallas as pl
from jax.experimental.pallas import tpu as pltpu


def _decoder_lstm_kernel(x_ref, wih_ref, b_ref, whh_ref, wout_ref, bout_ref,
                         h0_ref, c0_ref, logp_ref, hn_ref, cn_ref):
    """Fused DecoderLSTM forward (projection + recurrence + head).

    x_ref   : (T*B, E)   flattened input sequence
    wih_ref : (E, 4H)    W_ih^T, gate order [i|f|g|o] along lanes
    b_ref   : (1, 4H)    b_ih + b_hh
    whh_ref : (H, 4H)    W_hh^T, same lane-dense gate layout
    wout_ref: (H, 2)     linearOut weight^T
    bout_ref: (1, 2)     linearOut bias
    h0_ref, c0_ref : (B, H)
    logp_ref: (B, 2)     log_softmax(linearOut(h_T))
    hn_ref, cn_ref : (B, H)
    """
    TB, _ = x_ref.shape
    B, H = h0_ref.shape
    T = TB // B

    # Whole-sequence input projection: ONE lane-dense MXU call.
    proj = jnp.dot(x_ref[...], wih_ref[...],
                   preferred_element_type=jnp.float32) + b_ref[...]      # (T*B, 4H)
    whh = whh_ref[...]                                                   # (H, 4H)

    h = h0_ref[...]                                                      # (B, H)
    c = c0_ref[...]                                                      # (B, H)

    # T is static and tiny -> trace-time unrolled loop with static slices;
    # h/c are carried as values (registers) on the strictly serial path.
    for t in range(T):
        # Single fused recurrent matmul per step: (B, H) @ (H, 4H).
        gates = proj[t * B:(t + 1) * B, :] + jnp.dot(
            h, whh, preferred_element_type=jnp.float32)                  # (B, 4H)

        # One sigmoid (via tanh) + one tanh over the full lane-dense tile,
        # then static 32-lane gate extraction: [i | f | g | o].
        sig = 0.5 * jnp.tanh(0.5 * gates) + 0.5
        tnh = jnp.tanh(gates)
        i = sig[:, 0 * H:1 * H]
        f = sig[:, 1 * H:2 * H]
        g = tnh[:, 2 * H:3 * H]
        o = sig[:, 3 * H:4 * H]

        c = f * c + i * g
        h = o * jnp.tanh(c)

    hn_ref[...] = h
    cn_ref[...] = c

    # Tiny classification head on the last hidden state + stable log_softmax.
    logits = jnp.dot(h, wout_ref[...],
                     preferred_element_type=jnp.float32) + bout_ref[...]  # (B, 2)
    m = jnp.max(logits, axis=-1, keepdims=True)
    s = logits - m
    logp_ref[...] = s - jnp.log(jnp.sum(jnp.exp(s), axis=-1, keepdims=True))


@jax.jit
def decoder_lstm_forward(inputs, h0, c0, params):
    """inputs: (T, B, E); h0, c0: (B, H). Returns (logp (B, 2), (h_n, c_n))."""
    T, B, E = inputs.shape
    H = h0.shape[1]

    # Tiny one-time weight preprocessing in XLA (no activation-tensor transposes).
    x2d = inputs.reshape(T * B, E)                                # (T*B, E)
    wih_t = params["w_ih"].T                                      # (E, 4H) [i|f|g|o]
    bias = (params["b_ih"] + params["b_hh"]).reshape(1, 4 * H)    # (1, 4H)
    whh_t = params["w_hh"].T                                      # (H, 4H) [i|f|g|o]
    wout_t = params["w_out"].T                                    # (H, 2)
    bout = params["b_out"].reshape(1, 2)                          # (1, 2)

    vmem = pltpu.MemorySpace.VMEM
    flops = 2 * T * B * E * 4 * H + T * 2 * B * H * 4 * H + 2 * B * H * 2
    logp, h_n, c_n = pl.pallas_call(
        _decoder_lstm_kernel,
        out_shape=(jax.ShapeDtypeStruct((B, 2), jnp.float32),
                   jax.ShapeDtypeStruct((B, H), jnp.float32),
                   jax.ShapeDtypeStruct((B, H), jnp.float32)),
        in_specs=[pl.BlockSpec(memory_space=vmem)] * 8,
        out_specs=(pl.BlockSpec(memory_space=vmem),
                   pl.BlockSpec(memory_space=vmem),
                   pl.BlockSpec(memory_space=vmem)),
        # h0 -> h_n, c0 -> c_n buffer reuse on the latency-bound path.
        input_output_aliases={6: 1, 7: 2},
        cost_estimate=pl.CostEstimate(
            flops=flops,
            transcendentals=T * (2 * B * 4 * H + B * H) + 2 * B * 2,
            bytes_accessed=4 * (T * B * E + E * 4 * H + 4 * H + H * 4 * H
                                + H * 2 + 2 + 4 * B * H + B * 2)),
    )(x2d, wih_t, bias, whh_t, wout_t, bout, h0, c0)

    return logp, (h_n, c_n)


def _reference_forward(inputs, h0, c0, params):
    """Pure-JAX reference mirroring nn.LSTM + Linear + log_softmax."""
    H = h0.shape[1]
    w_ih, w_hh = params["w_ih"], params["w_hh"]
    b = params["b_ih"] + params["b_hh"]

    def step(carry, x_t):
        h, c = carry
        gates = x_t @ w_ih.T + h @ w_hh.T + b
        i = jax.nn.sigmoid(gates[:, 0 * H:1 * H])
        f = jax.nn.sigmoid(gates[:, 1 * H:2 * H])
        g = jnp.tanh(gates[:, 2 * H:3 * H])
        o = jax.nn.sigmoid(gates[:, 3 * H:4 * H])
        c_new = f * c + i * g
        h_new = o * jnp.tanh(c_new)
        return (h_new, c_new), h_new

    (h_n, c_n), _ = lax.scan(step, (h0, c0), inputs)
    logits = h_n @ params["w_out"].T + params["b_out"]
    logp = jax.nn.log_softmax(logits, axis=-1)
    return logp, (h_n, c_n)


if __name__ == "__main__":
    # Small, TPU-friendly sizes consistent with the module's forward.
    T, B, E, H = 8, 2, 16, 32

    key = jax.random.PRNGKey(0)
    keys = jax.random.split(key, 9)
    bound = 1.0 / jnp.sqrt(H)  # PyTorch-style uniform init bound

    params = {
        "w_ih": jax.random.uniform(keys[0], (4 * H, E), jnp.float32, -bound, bound),
        "w_hh": jax.random.uniform(keys[1], (4 * H, H), jnp.float32, -bound, bound),
        "b_ih": jax.random.uniform(keys[2], (4 * H,), jnp.float32, -bound, bound),
        "b_hh": jax.random.uniform(keys[3], (4 * H,), jnp.float32, -bound, bound),
        "w_out": jax.random.uniform(keys[4], (2, H), jnp.float32, -bound, bound),
        "b_out": jax.random.uniform(keys[5], (2,), jnp.float32, -bound, bound),
    }

    inputs = jax.random.normal(keys[6], (T, B, E), jnp.float32)
    h0 = jax.random.normal(keys[7], (B, H), jnp.float32)
    c0 = jax.random.normal(keys[8], (B, H), jnp.float32)

    logp, (h_n, c_n) = decoder_lstm_forward(inputs, h0, c0, params)
    jax.block_until_ready((logp, h_n, c_n))

    ref_logp, (ref_h, ref_c) = _reference_forward(inputs, h0, c0, params)
    assert jnp.allclose(logp, ref_logp, atol=1e-4, rtol=1e-4)
    assert jnp.allclose(h_n, ref_h, atol=1e-4, rtol=1e-4)
    assert jnp.allclose(c_n, ref_c, atol=1e-4, rtol=1e-4)

    print("KERNEL_OK")
</pallas_src>

<mosaic_0001>
module attributes {stable_mosaic.version = 11 : i64} {
  func.func @_decoder_lstm_kernel(%arg0: memref<16x16xf32, #tpu.memory_space<vmem>>, %arg1: memref<16x128xf32, #tpu.memory_space<vmem>>, %arg2: memref<1x128xf32, #tpu.memory_space<vmem>>, %arg3: memref<32x128xf32, #tpu.memory_space<vmem>>, %arg4: memref<32x2xf32, #tpu.memory_space<vmem>>, %arg5: memref<1x2xf32, #tpu.memory_space<vmem>>, %arg6: memref<2x32xf32, #tpu.memory_space<vmem>>, %arg7: memref<2x32xf32, #tpu.memory_space<vmem>>, %arg8: memref<2x2xf32, #tpu.memory_space<vmem>>, %arg9: memref<2x32xf32, #tpu.memory_space<vmem>>, %arg10: memref<2x32xf32, #tpu.memory_space<vmem>>) attributes {dimension_semantics = [], scalar_prefetch = 0 : i64, scratch_operands = 0 : i64, tpu.core_type = #tpu.core_type<tc>} {
    %c0 = arith.constant 0 : index
    %c0_0 = arith.constant 0 : index
    %0 = vector.load %arg0[%c0, %c0_0] : memref<16x16xf32, #tpu.memory_space<vmem>>, vector<16x16xf32>
    %c0_1 = arith.constant 0 : index
    %c0_2 = arith.constant 0 : index
    %1 = vector.load %arg1[%c0_1, %c0_2] : memref<16x128xf32, #tpu.memory_space<vmem>>, vector<16x128xf32>
    %cst = arith.constant dense<0.000000e+00> : vector<16x128xf32>
    %2 = tpu.matmul %0, %1, %cst {dimension_numbers = #tpu.dot_dimension_numbers<[1], [0], [0], [1], [0, 0, 1, 1], [], []>} : vector<16x16xf32>, vector<16x128xf32>, vector<16x128xf32> -> vector<16x128xf32>
    %c0_3 = arith.constant 0 : index
    %c0_4 = arith.constant 0 : index
    %3 = vector.load %arg2[%c0_3, %c0_4] : memref<1x128xf32, #tpu.memory_space<vmem>>, vector<1x128xf32>
    %4 = vector.broadcast %3 : vector<1x128xf32> to vector<16x128xf32>
    %5 = arith.addf %2, %4 : vector<16x128xf32>
    %c0_5 = arith.constant 0 : index
    %c0_6 = arith.constant 0 : index
    %6 = vector.load %arg3[%c0_5, %c0_6] : memref<32x128xf32, #tpu.memory_space<vmem>>, vector<32x128xf32>
    %c0_7 = arith.constant 0 : index
    %c0_8 = arith.constant 0 : index
    %7 = vector.load %arg6[%c0_7, %c0_8] : memref<2x32xf32, #tpu.memory_space<vmem>>, vector<2x32xf32>
    %c0_9 = arith.constant 0 : index
    %c0_10 = arith.constant 0 : index
    %8 = vector.load %arg7[%c0_9, %c0_10] : memref<2x32xf32, #tpu.memory_space<vmem>>, vector<2x32xf32>
    %9 = vector.extract_strided_slice %5 {offsets = [0, 0], sizes = [2, 128], strides = [1, 1]} : vector<16x128xf32> to vector<2x128xf32>
    %cst_11 = arith.constant dense<0.000000e+00> : vector<2x128xf32>
    %10 = tpu.matmul %7, %6, %cst_11 {dimension_numbers = #tpu.dot_dimension_numbers<[1], [0], [0], [1], [0, 0, 1, 1], [], []>} : vector<2x32xf32>, vector<32x128xf32>, vector<2x128xf32> -> vector<2x128xf32>
    %11 = arith.addf %9, %10 : vector<2x128xf32>
    %cst_12 = arith.constant 5.000000e-01 : f32
    %12 = vector.broadcast %cst_12 : f32 to vector<2x128xf32>
    %13 = arith.mulf %12, %11 : vector<2x128xf32>
    %14 = math.tanh %13 : vector<2x128xf32>
    %cst_13 = arith.constant 5.000000e-01 : f32
    %15 = vector.broadcast %cst_13 : f32 to vector<2x128xf32>
    %16 = arith.mulf %15, %14 : vector<2x128xf32>
    %cst_14 = arith.constant 5.000000e-01 : f32
    %17 = vector.broadcast %cst_14 : f32 to vector<2x128xf32>
    %18 = arith.addf %16, %17 : vector<2x128xf32>
    %19 = math.tanh %11 : vector<2x128xf32>
    %20 = vector.extract_strided_slice %18 {offsets = [0, 0], sizes = [2, 32], strides = [1, 1]} : vector<2x128xf32> to vector<2x32xf32>
    %21 = vector.extract_strided_slice %18 {offsets = [0, 32], sizes = [2, 32], strides = [1, 1]} : vector<2x128xf32> to vector<2x32xf32>
    %22 = vector.extract_strided_slice %19 {offsets = [0, 64], sizes = [2, 32], strides = [1, 1]} : vector<2x128xf32> to vector<2x32xf32>
    %23 = vector.extract_strided_slice %18 {offsets = [0, 96], sizes = [2, 32], strides = [1, 1]} : vector<2x128xf32> to vector<2x32xf32>
    %24 = arith.mulf %21, %8 : vector<2x32xf32>
    %25 = arith.mulf %20, %22 : vector<2x32xf32>
    %26 = arith.addf %24, %25 : vector<2x32xf32>
    %27 = math.tanh %26 : vector<2x32xf32>
    %28 = arith.mulf %23, %27 : vector<2x32xf32>
    %29 = vector.extract_strided_slice %5 {offsets = [2, 0], sizes = [2, 128], strides = [1, 1]} : vector<16x128xf32> to vector<2x128xf32>
    %cst_15 = arith.constant dense<0.000000e+00> : vector<2x128xf32>
    %30 = tpu.matmul %28, %6, %cst_15 {dimension_numbers = #tpu.dot_dimension_numbers<[1], [0], [0], [1], [0, 0, 1, 1], [], []>} : vector<2x32xf32>, vector<32x128xf32>, vector<2x128xf32> -> vector<2x128xf32>
    %31 = arith.addf %29, %30 : vector<2x128xf32>
    %cst_16 = arith.constant 5.000000e-01 : f32
    %32 = vector.broadcast %cst_16 : f32 to vector<2x128xf32>
    %33 = arith.mulf %32, %31 : vector<2x128xf32>
    %34 = math.tanh %33 : vector<2x128xf32>
    %cst_17 = arith.constant 5.000000e-01 : f32
    %35 = vector.broadcast %cst_17 : f32 to vector<2x128xf32>
    %36 = arith.mulf %35, %34 : vector<2x128xf32>
    %cst_18 = arith.constant 5.000000e-01 : f32
    %37 = vector.broadcast %cst_18 : f32 to vector<2x128xf32>
    %38 = arith.addf %36, %37 : vector<2x128xf32>
    %39 = math.tanh %31 : vector<2x128xf32>
    %40 = vector.extract_strided_slice %38 {offsets = [0, 0], sizes = [2, 32], strides = [1, 1]} : vector<2x128xf32> to vector<2x32xf32>
    %41 = vector.extract_strided_slice %38 {offsets = [0, 32], sizes = [2, 32], strides = [1, 1]} : vector<2x128xf32> to vector<2x32xf32>
    %42 = vector.extract_strided_slice %39 {offsets = [0, 64], sizes = [2, 32], strides = [1, 1]} : vector<2x128xf32> to vector<2x32xf32>
    %43 = vector.extract_strided_slice %38 {offsets = [0, 96], sizes = [2, 32], strides = [1, 1]} : vector<2x128xf32> to vector<2x32xf32>
    %44 = arith.mulf %41, %26 : vector<2x32xf32>
    %45 = arith.mulf %40, %42 : vector<2x32xf32>
    %46 = arith.addf %44, %45 : vector<2x32xf32>
    %47 = math.tanh %46 : vector<2x32xf32>
    %48 = arith.mulf %43, %47 : vector<2x32xf32>
    %49 = vector.extract_strided_slice %5 {offsets = [4, 0], sizes = [2, 128], strides = [1, 1]} : vector<16x128xf32> to vector<2x128xf32>
    %cst_19 = arith.constant dense<0.000000e+00> : vector<2x128xf32>
    %50 = tpu.matmul %48, %6, %cst_19 {dimension_numbers = #tpu.dot_dimension_numbers<[1], [0], [0], [1], [0, 0, 1, 1], [], []>} : vector<2x32xf32>, vector<32x128xf32>, vector<2x128xf32> -> vector<2x128xf32>
    %51 = arith.addf %49, %50 : vector<2x128xf32>
    %cst_20 = arith.constant 5.000000e-01 : f32
    %52 = vector.broadcast %cst_20 : f32 to vector<2x128xf32>
    %53 = arith.mulf %52, %51 : vector<2x128xf32>
    %54 = math.tanh %53 : vector<2x128xf32>
    %cst_21 = arith.constant 5.000000e-01 : f32
    %55 = vector.broadcast %cst_21 : f32 to vector<2x128xf32>
    %56 = arith.mulf %55, %54 : vector<2x128xf32>
    %cst_22 = arith.constant 5.000000e-01 : f32
    %57 = vector.broadcast %cst_22 : f32 to vector<2x128xf32>
    %58 = arith.addf %56, %57 : vector<2x128xf32>
    %59 = math.tanh %51 : vector<2x128xf32>
    %60 = vector.extract_strided_slice %58 {offsets = [0, 0], sizes = [2, 32], strides = [1, 1]} : vector<2x128xf32> to vector<2x32xf32>
    %61 = vector.extract_strided_slice %58 {offsets = [0, 32], sizes = [2, 32], strides = [1, 1]} : vector<2x128xf32> to vector<2x32xf32>
    %62 = vector.extract_strided_slice %59 {offsets = [0, 64], sizes = [2, 32], strides = [1, 1]} : vector<2x128xf32> to vector<2x32xf32>
    %63 = vector.extract_strided_slice %58 {offsets = [0, 96], sizes = [2, 32], strides = [1, 1]} : vector<2x128xf32> to vector<2x32xf32>
    %64 = arith.mulf %61, %46 : vector<2x32xf32>
    %65 = arith.mulf %60, %62 : vector<2x32xf32>
    %66 = arith.addf %64, %65 : vector<2x32xf32>
    %67 = math.tanh %66 : vector<2x32xf32>
    %68 = arith.mulf %63, %67 : vector<2x32xf32>
    %69 = vector.extract_strided_slice %5 {offsets = [6, 0], sizes = [2, 128], strides = [1, 1]} : vector<16x128xf32> to vector<2x128xf32>
    %cst_23 = arith.constant dense<0.000000e+00> : vector<2x128xf32>
    %70 = tpu.matmul %68, %6, %cst_23 {dimension_numbers = #tpu.dot_dimension_numbers<[1], [0], [0], [1], [0, 0, 1, 1], [], []>} : vector<2x32xf32>, vector<32x128xf32>, vector<2x128xf32> -> vector<2x128xf32>
    %71 = arith.addf %69, %70 : vector<2x128xf32>
    %cst_24 = arith.constant 5.000000e-01 : f32
    %72 = vector.broadcast %cst_24 : f32 to vector<2x128xf32>
    %73 = arith.mulf %72, %71 : vector<2x128xf32>
    %74 = math.tanh %73 : vector<2x128xf32>
    %cst_25 = arith.constant 5.000000e-01 : f32
    %75 = vector.broadcast %cst_25 : f32 to vector<2x128xf32>
    %76 = arith.mulf %75, %74 : vector<2x128xf32>
    %cst_26 = arith.constant 5.000000e-01 : f32
    %77 = vector.broadcast %cst_26 : f32 to vector<2x128xf32>
    %78 = arith.addf %76, %77 : vector<2x128xf32>
    %79 = math.tanh %71 : vector<2x128xf32>
    %80 = vector.extract_strided_slice %78 {offsets = [0, 0], sizes = [2, 32], strides = [1, 1]} : vector<2x128xf32> to vector<2x32xf32>
    %81 = vector.extract_strided_slice %78 {offsets = [0, 32], sizes = [2, 32], strides = [1, 1]} : vector<2x128xf32> to vector<2x32xf32>
    %82 = vector.extract_strided_slice %79 {offsets = [0, 64], sizes = [2, 32], strides = [1, 1]} : vector<2x128xf32> to vector<2x32xf32>
    %83 = vector.extract_strided_slice %78 {offsets = [0, 96], sizes = [2, 32], strides = [1, 1]} : vector<2x128xf32> to vector<2x32xf32>
    %84 = arith.mulf %81, %66 : vector<2x32xf32>
    %85 = arith.mulf %80, %82 : vector<2x32xf32>
    %86 = arith.addf %84, %85 : vector<2x32xf32>
    %87 = math.tanh %86 : vector<2x32xf32>
    %88 = arith.mulf %83, %87 : vector<2x32xf32>
    %89 = vector.extract_strided_slice %5 {offsets = [8, 0], sizes = [2, 128], strides = [1, 1]} : vector<16x128xf32> to vector<2x128xf32>
    %cst_27 = arith.constant dense<0.000000e+00> : vector<2x128xf32>
    %90 = tpu.matmul %88, %6, %cst_27 {dimension_numbers = #tpu.dot_dimension_numbers<[1], [0], [0], [1], [0, 0, 1, 1], [], []>} : vector<2x32xf32>, vector<32x128xf32>, vector<2x128xf32> -> vector<2x128xf32>
    %91 = arith.addf %89, %90 : vector<2x128xf32>
    %cst_28 = arith.constant 5.000000e-01 : f32
    %92 = vector.broadcast %cst_28 : f32 to vector<2x128xf32>
    %93 = arith.mulf %92, %91 : vector<2x128xf32>
    %94 = math.tanh %93 : vector<2x128xf32>
    %cst_29 = arith.constant 5.000000e-01 : f32
    %95 = vector.broadcast %cst_29 : f32 to vector<2x128xf32>
    %96 = arith.mulf %95, %94 : vector<2x128xf32>
    %cst_30 = arith.constant 5.000000e-01 : f32
    %97 = vector.broadcast %cst_30 : f32 to vector<2x128xf32>
    %98 = arith.addf %96, %97 : vector<2x128xf32>
    %99 = math.tanh %91 : vector<2x128xf32>
    %100 = vector.extract_strided_slice %98 {offsets = [0, 0], sizes = [2, 32], strides = [1, 1]} : vector<2x128xf32> to vector<2x32xf32>
    %101 = vector.extract_strided_slice %98 {offsets = [0, 32], sizes = [2, 32], strides = [1, 1]} : vector<2x128xf32> to vector<2x32xf32>
    %102 = vector.extract_strided_slice %99 {offsets = [0, 64], sizes = [2, 32], strides = [1, 1]} : vector<2x128xf32> to vector<2x32xf32>
    %103 = vector.extract_strided_slice %98 {offsets = [0, 96], sizes = [2, 32], strides = [1, 1]} : vector<2x128xf32> to vector<2x32xf32>
    %104 = arith.mulf %101, %86 : vector<2x32xf32>
    %105 = arith.mulf %100, %102 : vector<2x32xf32>
    %106 = arith.addf %104, %105 : vector<2x32xf32>
    %107 = math.tanh %106 : vector<2x32xf32>
    %108 = arith.mulf %103, %107 : vector<2x32xf32>
    %109 = vector.extract_strided_slice %5 {offsets = [10, 0], sizes = [2, 128], strides = [1, 1]} : vector<16x128xf32> to vector<2x128xf32>
    %cst_31 = arith.constant dense<0.000000e+00> : vector<2x128xf32>
    %110 = tpu.matmul %108, %6, %cst_31 {dimension_numbers = #tpu.dot_dimension_numbers<[1], [0], [0], [1], [0, 0, 1, 1], [], []>} : vector<2x32xf32>, vector<32x128xf32>, vector<2x128xf32> -> vector<2x128xf32>
    %111 = arith.addf %109, %110 : vector<2x128xf32>
    %cst_32 = arith.constant 5.000000e-01 : f32
    %112 = vector.broadcast %cst_32 : f32 to vector<2x128xf32>
    %113 = arith.mulf %112, %111 : vector<2x128xf32>
    %114 = math.tanh %113 : vector<2x128xf32>
    %cst_33 = arith.constant 5.000000e-01 : f32
    %115 = vector.broadcast %cst_33 : f32 to vector<2x128xf32>
    %116 = arith.mulf %115, %114 : vector<2x128xf32>
    %cst_34 = arith.constant 5.000000e-01 : f32
    %117 = vector.broadcast %cst_34 : f32 to vector<2x128xf32>
    %118 = arith.addf %116, %117 : vector<2x128xf32>
    %119 = math.tanh %111 : vector<2x128xf32>
    %120 = vector.extract_strided_slice %118 {offsets = [0, 0], sizes = [2, 32], strides = [1, 1]} : vector<2x128xf32> to vector<2x32xf32>
    %121 = vector.extract_strided_slice %118 {offsets = [0, 32], sizes = [2, 32], strides = [1, 1]} : vector<2x128xf32> to vector<2x32xf32>
    %122 = vector.extract_strided_slice %119 {offsets = [0, 64], sizes = [2, 32], strides = [1, 1]} : vector<2x128xf32> to vector<2x32xf32>
    %123 = vector.extract_strided_slice %118 {offsets = [0, 96], sizes = [2, 32], strides = [1, 1]} : vector<2x128xf32> to vector<2x32xf32>
    %124 = arith.mulf %121, %106 : vector<2x32xf32>
    %125 = arith.mulf %120, %122 : vector<2x32xf32>
    %126 = arith.addf %124, %125 : vector<2x32xf32>
    %127 = math.tanh %126 : vector<2x32xf32>
    %128 = arith.mulf %123, %127 : vector<2x32xf32>
    %129 = vector.extract_strided_slice %5 {offsets = [12, 0], sizes = [2, 128], strides = [1, 1]} : vector<16x128xf32> to vector<2x128xf32>
    %cst_35 = arith.constant dense<0.000000e+00> : vector<2x128xf32>
    %130 = tpu.matmul %128, %6, %cst_35 {dimension_numbers = #tpu.dot_dimension_numbers<[1], [0], [0], [1], [0, 0, 1, 1], [], []>} : vector<2x32xf32>, vector<32x128xf32>, vector<2x128xf32> -> vector<2x128xf32>
    %131 = arith.addf %129, %130 : vector<2x128xf32>
    %cst_36 = arith.constant 5.000000e-01 : f32
    %132 = vector.broadcast %cst_36 : f32 to vector<2x128xf32>
    %133 = arith.mulf %132, %131 : vector<2x128xf32>
    %134 = math.tanh %133 : vector<2x128xf32>
    %cst_37 = arith.constant 5.000000e-01 : f32
    %135 = vector.broadcast %cst_37 : f32 to vector<2x128xf32>
    %136 = arith.mulf %135, %134 : vector<2x128xf32>
    %cst_38 = arith.constant 5.000000e-01 : f32
    %137 = vector.broadcast %cst_38 : f32 to vector<2x128xf32>
    %138 = arith.addf %136, %137 : vector<2x128xf32>
    %139 = math.tanh %131 : vector<2x128xf32>
    %140 = vector.extract_strided_slice %138 {offsets = [0, 0], sizes = [2, 32], strides = [1, 1]} : vector<2x128xf32> to vector<2x32xf32>
    %141 = vector.extract_strided_slice %138 {offsets = [0, 32], sizes = [2, 32], strides = [1, 1]} : vector<2x128xf32> to vector<2x32xf32>
    %142 = vector.extract_strided_slice %139 {offsets = [0, 64], sizes = [2, 32], strides = [1, 1]} : vector<2x128xf32> to vector<2x32xf32>
    %143 = vector.extract_strided_slice %138 {offsets = [0, 96], sizes = [2, 32], strides = [1, 1]} : vector<2x128xf32> to vector<2x32xf32>
    %144 = arith.mulf %141, %126 : vector<2x32xf32>
    %145 = arith.mulf %140, %142 : vector<2x32xf32>
    %146 = arith.addf %144, %145 : vector<2x32xf32>
    %147 = math.tanh %146 : vector<2x32xf32>
    %148 = arith.mulf %143, %147 : vector<2x32xf32>
    %149 = vector.extract_strided_slice %5 {offsets = [14, 0], sizes = [2, 128], strides = [1, 1]} : vector<16x128xf32> to vector<2x128xf32>
    %cst_39 = arith.constant dense<0.000000e+00> : vector<2x128xf32>
    %150 = tpu.matmul %148, %6, %cst_39 {dimension_numbers = #tpu.dot_dimension_numbers<[1], [0], [0], [1], [0, 0, 1, 1], [], []>} : vector<2x32xf32>, vector<32x128xf32>, vector<2x128xf32> -> vector<2x128xf32>
    %151 = arith.addf %149, %150 : vector<2x128xf32>
    %cst_40 = arith.constant 5.000000e-01 : f32
    %152 = vector.broadcast %cst_40 : f32 to vector<2x128xf32>
    %153 = arith.mulf %152, %151 : vector<2x128xf32>
    %154 = math.tanh %153 : vector<2x128xf32>
    %cst_41 = arith.constant 5.000000e-01 : f32
    %155 = vector.broadcast %cst_41 : f32 to vector<2x128xf32>
    %156 = arith.mulf %155, %154 : vector<2x128xf32>
    %cst_42 = arith.constant 5.000000e-01 : f32
    %157 = vector.broadcast %cst_42 : f32 to vector<2x128xf32>
    %158 = arith.addf %156, %157 : vector<2x128xf32>
    %159 = math.tanh %151 : vector<2x128xf32>
    %160 = vector.extract_strided_slice %158 {offsets = [0, 0], sizes = [2, 32], strides = [1, 1]} : vector<2x128xf32> to vector<2x32xf32>
    %161 = vector.extract_strided_slice %158 {offsets = [0, 32], sizes = [2, 32], strides = [1, 1]} : vector<2x128xf32> to vector<2x32xf32>
    %162 = vector.extract_strided_slice %159 {offsets = [0, 64], sizes = [2, 32], strides = [1, 1]} : vector<2x128xf32> to vector<2x32xf32>
    %163 = vector.extract_strided_slice %158 {offsets = [0, 96], sizes = [2, 32], strides = [1, 1]} : vector<2x128xf32> to vector<2x32xf32>
    %164 = arith.mulf %161, %146 : vector<2x32xf32>
    %165 = arith.mulf %160, %162 : vector<2x32xf32>
    %166 = arith.addf %164, %165 : vector<2x32xf32>
    %167 = math.tanh %166 : vector<2x32xf32>
    %168 = arith.mulf %163, %167 : vector<2x32xf32>
    %c0_43 = arith.constant 0 : index
    %c0_44 = arith.constant 0 : index
    %169 = vector.load %arg9[%c0_43, %c0_44] : memref<2x32xf32, #tpu.memory_space<vmem>>, vector<2x32xf32>
    tpu.vector_store %arg9[%c0_43, %c0_44], %168 {strides = array<i32>} : memref<2x32xf32, #tpu.memory_space<vmem>>, vector<2x32xf32>,
    %c0_45 = arith.constant 0 : index
    %c0_46 = arith.constant 0 : index
    %170 = vector.load %arg10[%c0_45, %c0_46] : memref<2x32xf32, #tpu.memory_space<vmem>>, vector<2x32xf32>
    tpu.vector_store %arg10[%c0_45, %c0_46], %166 {strides = array<i32>} : memref<2x32xf32, #tpu.memory_space<vmem>>, vector<2x32xf32>,
    %c0_47 = arith.constant 0 : index
    %c0_48 = arith.constant 0 : index
    %171 = vector.load %arg4[%c0_47, %c0_48] : memref<32x2xf32, #tpu.memory_space<vmem>>, vector<32x2xf32>
    %cst_49 = arith.constant dense<0.000000e+00> : vector<2x2xf32>
    %172 = tpu.matmul %168, %171, %cst_49 {dimension_numbers = #tpu.dot_dimension_numbers<[1], [0], [0], [1], [0, 0, 1, 1], [], []>} : vector<2x32xf32>, vector<32x2xf32>, vector<2x2xf32> -> vector<2x2xf32>
    %c0_50 = arith.constant 0 : index
    %c0_51 = arith.constant 0 : index
    %173 = vector.load %arg5[%c0_50, %c0_51] : memref<1x2xf32, #tpu.memory_space<vmem>>, vector<1x2xf32>
    %174 = vector.broadcast %173 : vector<1x2xf32> to vector<2x2xf32>
    %175 = arith.addf %172, %174 : vector<2x2xf32>
    %cst_52 = arith.constant dense<0xFF800000> : vector<2xf32>
    %176 = vector.multi_reduction <maximumf>, %175, %cst_52 [1] : vector<2x2xf32> to vector<2xf32>
    %177 = vector.shape_cast %176 : vector<2xf32> to vector<2x1xf32>
    %178 = vector.broadcast %177 : vector<2x1xf32> to vector<2x2xf32>
    %179 = arith.subf %175, %178 : vector<2x2xf32>
    %180 = math.exp %179 : vector<2x2xf32>
    %cst_53 = arith.constant dense<0.000000e+00> : vector<2xf32>
    %181 = vector.multi_reduction <add>, %180, %cst_53 [1] : vector<2x2xf32> to vector<2xf32>
    %182 = vector.shape_cast %181 : vector<2xf32> to vector<2x1xf32>
    %183 = math.log %182 : vector<2x1xf32>
    %184 = vector.broadcast %183 : vector<2x1xf32> to vector<2x2xf32>
    %185 = arith.subf %179, %184 : vector<2x2xf32>
    %c0_54 = arith.constant 0 : index
    %c0_55 = arith.constant 0 : index
    %186 = vector.load %arg8[%c0_54, %c0_55] : memref<2x2xf32, #tpu.memory_space<vmem>>, vector<2x2xf32>
    tpu.vector_store %arg8[%c0_54, %c0_55], %185 {strides = array<i32>} : memref<2x2xf32, #tpu.memory_space<vmem>>, vector<2x2xf32>,
    return
  }
}

</mosaic_0001>

<llo_original>
// kernel: decoder_lstm_forward.1
$region0: #{decoder_lstm_forward.1}
  #allocation0 [shape = 'u32[]', space=smem, size = 0x4, offset = 0x4, fixed_abs, tag = 'smem constant byte address 0x4 - core index']
  #allocation1 [shape = 'u32[72,128]{1,0:T(1,128)}', space=vmem, size = 0x9000, scoped, tag = 'internal scratch']
  %s0 = inlined_call_operand.vmem [shape: f32[16,16], index: 0, kind: input, shape index: {}]
  %s1 = inlined_call_operand.hbm [shape: f32[16,128], index: 1, kind: input, shape index: {}]
  %s2 = inlined_call_operand.vmem [shape: f32[1,128], index: 2, kind: input, shape index: {}]
  %s3 = inlined_call_operand.vmem [shape: f32[32,128], index: 3, kind: input, shape index: {}]
  %s4 = inlined_call_operand.vmem [shape: f32[32,2], index: 4, kind: input, shape index: {}]
  %s5 = inlined_call_operand.vmem [shape: f32[1,2], index: 5, kind: input, shape index: {}]
  %s6 = inlined_call_operand.hbm [shape: f32[2,32], index: 6, kind: input, shape index: {}, may-alias: {6,9}]
  %s7 = inlined_call_operand.hbm [shape: f32[2,32], index: 7, kind: input, shape index: {}, may-alias: {7,10}]
  %s8 = inlined_call_operand.hbm [shape: f32[2,2], index: 8, kind: output, shape index: {0}]
  %s9 = inlined_call_operand.hbm [shape: f32[2,32], index: 9, kind: output, shape index: {1}, may-alias: {6,9}]
  %s10 = inlined_call_operand.hbm [shape: f32[2,32], index: 10, kind: output, shape index: {2}, may-alias: {7,10}]
  %11 = xla_tuple %s8, %s9, %s10
  %s12 = sld [smem:[#allocation0]]
  $region70: #{decoder_lstm_forward.1} parent=0
    _
  %s14 = ssub.s32 1, %s12
  %s15 = scalar_select 0, %s14, %s12
  $region1: #{decoder_lstm_forward.1} parent=0
    #allocation2 [shape = 'u8[8192]{0}', space=vmem, size = 0x2000, scoped, tag = 'input window, operand 1, single buffered']
    #allocation3 [shape = 's32[1]{0}', space=sflag, size = 0x4, scoped, tag = 'scoped memory for decoder_lstm_forward.1']
    #allocation4 [shape = 's32[1]{0}', space=sflag, size = 0x4, scoped, tag = 'scoped memory for decoder_lstm_forward.1']
    #allocation5 [shape = 'u8[1024]{0}', space=vmem, size = 0x400, scoped, tag = 'input window, operand 6, single buffered']
    #allocation6 [shape = 's32[1]{0}', space=sflag, size = 0x4, scoped, tag = 'scoped memory for decoder_lstm_forward.1']
    #allocation7 [shape = 'u8[1024]{0}', space=vmem, size = 0x400, scoped, tag = 'input window, operand 7, single buffered']
    #allocation8 [shape = 'u8[1024]{0}', space=vmem, size = 0x400, scoped, tag = 'output window, operand 0, single buffered']
    #allocation9 [shape = 'u8[1024]{0}', space=vmem, size = 0x400, scoped, tag = 'output window, operand 1, single buffered']
    #allocation10 [shape = 's32[1]{0}', space=sflag, size = 0x4, scoped, tag = 'scoped memory for decoder_lstm_forward.1']
    #allocation11 [shape = 'u8[1024]{0}', space=vmem, size = 0x400, scoped, tag = 'output window, operand 2, single buffered']
    %16 = vsyncpa [#allocation3], 0
    %17 = vsyncpa [#allocation6], 0
    %18 = vsyncpa [#allocation4], 0
    %19 = vsyncpa [#allocation10], 0
    // Predicated region
    $region2: #{decoder_lstm_forward.1} parent=1 // pred_check
      _
    $region3: #{decoder_lstm_forward.1} parent=1 // pred_check_branch
      %21 = sbr.rel (0) target = $region5
    $region4: #{decoder_lstm_forward.1} parent=1 // pred_region
      _
    $region5: #{decoder_lstm_forward.1} parent=1 // pred_fallthru
      _
    // Predicated region
    $region6: #{decoder_lstm_forward.1} parent=1 // pred_check
      _
    $region7: #{decoder_lstm_forward.1} parent=1 // pred_check_branch
      %23 = sbr.rel (0) target = $region9
    $region8: #{decoder_lstm_forward.1} parent=1 // pred_region
      %25 = vsyncadd [#allocation3], 0
      %s26 = sshll.u32 %s1, 4
      %s27 = int_to_ptr.hbm [resolvable:$true] %s26
      %s28 = sshll.u32 [#allocation2], 4
      %s29 = int_to_ptr.vmem [resolvable:$true] %s28
      %34 = dma.hbm_to_vmem [thread:$0]  %s27, 256, %s29, [#allocation3], 128, 128, 8
    $region9: #{decoder_lstm_forward.1} parent=1 // pred_fallthru
      _
    // Predicated region
    $region10: #{decoder_lstm_forward.1} parent=1 // pred_check
      _
    $region11: #{decoder_lstm_forward.1} parent=1 // pred_check_branch
      %36 = sbr.rel (0) target = $region13
    $region12: #{decoder_lstm_forward.1} parent=1 // pred_region
      _
    $region13: #{decoder_lstm_forward.1} parent=1 // pred_fallthru
      _
    // Predicated region
    $region14: #{decoder_lstm_forward.1} parent=1 // pred_check
      _
    $region15: #{decoder_lstm_forward.1} parent=1 // pred_check_branch
      %38 = sbr.rel (0) target = $region17
    $region16: #{decoder_lstm_forward.1} parent=1 // pred_region
      _
    $region17: #{decoder_lstm_forward.1} parent=1 // pred_fallthru
      _
    // Predicated region
    $region18: #{decoder_lstm_forward.1} parent=1 // pred_check
      _
    $region19: #{decoder_lstm_forward.1} parent=1 // pred_check_branch
      %40 = sbr.rel (0) target = $region21
    $region20: #{decoder_lstm_forward.1} parent=1 // pred_region
      _
    $region21: #{decoder_lstm_forward.1} parent=1 // pred_fallthru
      _
    // Predicated region
    $region22: #{decoder_lstm_forward.1} parent=1 // pred_check
      _
    $region23: #{decoder_lstm_forward.1} parent=1 // pred_check_branch
      %42 = sbr.rel (0) target = $region25
    $region24: #{decoder_lstm_forward.1} parent=1 // pred_region
      _
    $region25: #{decoder_lstm_forward.1} parent=1 // pred_fallthru
      _
    // Predicated region
    $region26: #{decoder_lstm_forward.1} parent=1 // pred_check
      _
    $region27: #{decoder_lstm_forward.1} parent=1 // pred_check_branch
      %44 = sbr.rel (0) target = $region29
    $region28: #{decoder_lstm_forward.1} parent=1 // pred_region
      %46 = vsyncadd [#allocation6], 0
      %s48 = sshll.u32 %s6, 4
      %s49 = int_to_ptr.hbm [resolvable:$true] %s48
      %s50 = sshll.u32 [#allocation5], 4
      %s51 = int_to_ptr.vmem [resolvable:$true] %s50
      %53 = dma.hbm_to_vmem [thread:$0]  %s49, 32, %s51, [#allocation6]
    $region29: #{decoder_lstm_forward.1} parent=1 // pred_fallthru
      _
    // Predicated region
    $region30: #{decoder_lstm_forward.1} parent=1 // pred_check
      _
    $region31: #{decoder_lstm_forward.1} parent=1 // pred_check_branch
      %55 = sbr.rel (0) target = $region33
    $region32: #{decoder_lstm_forward.1} parent=1 // pred_region
      %57 = vsyncadd [#allocation6], 0
      %s59 = sshll.u32 %s7, 4
      %s60 = int_to_ptr.hbm [resolvable:$true] %s59
      %s61 = sshll.u32 [#allocation7], 4
      %s62 = int_to_ptr.vmem [resolvable:$true] %s61
      %64 = dma.hbm_to_vmem [thread:$0]  %s60, 32, %s62, [#allocation6]
    $region33: #{decoder_lstm_forward.1} parent=1 // pred_fallthru
      _
    // Predicated region
    $region34: #{decoder_lstm_forward.1} parent=1 // pred_check
      _
    $region35: #{decoder_lstm_forward.1} parent=1 // pred_check_branch
      %66 = sbr.rel (0) target = $region37
    $region36: #{decoder_lstm_forward.1} parent=1 // pred_region
      %68 = dma.done [#allocation3], 256
    $region37: #{decoder_lstm_forward.1} parent=1 // pred_fallthru
      _
    // Predicated region
    $region38: #{decoder_lstm_forward.1} parent=1 // pred_check
      _
    $region39: #{decoder_lstm_forward.1} parent=1 // pred_check_branch
      %70 = sbr.rel (0) target = $region41
    $region40: #{decoder_lstm_forward.1} parent=1 // pred_region
      %72 = dma.done [#allocation6], 32
    $region41: #{decoder_lstm_forward.1} parent=1 // pred_fallthru
      _
    // Predicated region
    $region42: #{decoder_lstm_forward.1} parent=1 // pred_check
      _
    $region43: #{decoder_lstm_forward.1} parent=1 // pred_check_branch
      %74 = sbr.rel (0) target = $region45
    $region44: #{decoder_lstm_forward.1} parent=1 // pred_region
      %76 = dma.done [#allocation6], 32
    $region45: #{decoder_lstm_forward.1} parent=1 // pred_fallthru
      _
    %v77 = vld [vmem:[%s0] sm:$0xff]
    %v78 = vld [vmem:[%s0 + $0x8] sm:$0xff]
    %v79 = vld [vmem:[#allocation2] sm:$0xff]
    %v80 = vld [vmem:[#allocation2 + $0x8] sm:$0xff]
    %v81 = vld [vmem:[%s2] sm:$0x1]
    %v83 = vperm.slane %v81, 0
    %vm85 = vcmask 130048
    %v87 = vsel %vm85, %v77, 0
    %v90 = vsel %vm85, %v78, 0
    %92 = vmatpush.msra.mxu0 0.0
    %93 = vmatpush.msra.mxu0 0.0
    %94 = vmatpush.msra.mxu0 0.0
    %95 = vmatpush.msra.mxu0 0.0
    %96 = vmatpush.msra.mxu0 0.0
    %97 = vmatpush.msra.mxu0 0.0
    %98 = vmatpush.msra.mxu0 0.0
    %99 = vmatpush.msra.mxu0 0.0
    %100 = vmatpush.msra.mxu0 0.0
    %101 = vmatpush.msra.mxu0 0.0
    %102 = vmatpush.msra.mxu0 0.0
    %103 = vmatpush.msra.mxu0 0.0
    %104 = vmatpush.msra.mxu0 0.0
    %105 = vmatpush.msra.mxu0 0.0
    %106 = vmatpush.msra.mxu0 %v80
    %107 = vmatpush.msra.mxu0 %v79
    %108 = vmatmul.f32.gmra.mxu0 %v87
    %v109 = vpop.f32.mrf.mxu0
    %v110 = vadd.f32 %v83, %v109
    %111 = vmatmul.f32.gmra.mxu0 %v90
    %v112 = vpop.f32.mrf.mxu0
    %v113 = vadd.f32 %v83, %v112
    %114 = vdwg.mxu0
    %v115 = vld [vmem:[%s3] sm:$0xff]
    %v116 = vld [vmem:[%s3 + $0x8] sm:$0xff]
    %v117 = vld [vmem:[%s3 + $0x10] sm:$0xff]
    %v118 = vld [vmem:[%s3 + $0x18] sm:$0xff]
    %v119 = vld [vmem:[#allocation5] sm:$0x3]
    %v120 = vld [vmem:[#allocation7] sm:$0x3]
    %vm121 = vcmask 261120
    %v123 = vsel %vm121, %v119, 0
    %125 = vmatpush.msra.mxu0 0.0
    %126 = vmatpush.msra.mxu0 0.0
    %127 = vmatpush.msra.mxu0 0.0
    %128 = vmatpush.msra.mxu0 0.0
    %129 = vmatpush.msra.mxu0 0.0
    %130 = vmatpush.msra.mxu0 0.0
    %131 = vmatpush.msra.mxu0 0.0
    %132 = vmatpush.msra.mxu0 0.0
    %133 = vmatpush.msra.mxu0 0.0
    %134 = vmatpush.msra.mxu0 0.0
    %135 = vmatpush.msra.mxu0 0.0
    %136 = vmatpush.msra.mxu0 0.0
    %137 = vmatpush.msra.mxu0 %v118
    %138 = vmatpush.msra.mxu0 %v117
    %139 = vmatpush.msra.mxu0 %v116
    %140 = vmatpush.msra.mxu0 %v115
    %141 = vmatmul.f32.gmra.mxu0 %v123
    %v142 = vpop.f32.mrf.mxu0
    %v143 = vadd.f32 0.0, %v142
    %144 = vdwg.mxu0
    %v145 = vadd.f32 %v110, %v143
    %v146 = vmul.f32 %v145, 0.5
    %v147 = vtanh.pop %v146
    %v148 = vmul.f32 %v147, 0.5
    %v149 = vadd.f32 %v148, 0.5
    %v150 = vtanh.pop %v145
    %152 = vrot.lane.b32.xlu0 %v120, 32
    %v153 = vpop.permute.xlu0 %152
    %v155 = vmul.f32 %v149, %v153
    %157 = vrot.lane.b32.xlu0 %v150, 64
    %v158 = vpop.permute.xlu0 %157
    %v160 = vmul.f32 %v149, %v158
    %162 = vrot.lane.b32.xlu0 %v160, 32
    %v163 = vpop.permute.xlu0 %162
    %v165 = vadd.f32 %v155, %v163
    %v166 = vtanh.pop %v165
    %168 = vrot.lane.b32.xlu0 %v166, 64
    %v169 = vpop.permute.xlu0 %168
    %v171 = vmul.f32 %v149, %v169
    %173 = vrot.lane.b32.xlu0 %v171, 32
    %v174 = vpop.permute.xlu0 %173
    %v175 = vsel %vm121, %v174, 0
    %177 = vmatpush.msra.mxu0 0.0
    %178 = vmatpush.msra.mxu0 0.0
    %179 = vmatpush.msra.mxu0 0.0
    %180 = vmatpush.msra.mxu0 0.0
    %181 = vmatpush.msra.mxu0 0.0
    %182 = vmatpush.msra.mxu0 0.0
    %183 = vmatpush.msra.mxu0 0.0
    %184 = vmatpush.msra.mxu0 0.0
    %185 = vmatpush.msra.mxu0 0.0
    %186 = vmatpush.msra.mxu0 0.0
    %187 = vmatpush.msra.mxu0 0.0
    %188 = vmatpush.msra.mxu0 0.0
    %189 = vmatpush.msra.mxu0 %v118
    %190 = vmatpush.msra.mxu0 %v117
    %191 = vmatpush.msra.mxu0 %v116
    %192 = vmatpush.msra.mxu0 %v115
    %193 = vmatmul.f32.gmra.mxu0 %v175
    %v194 = vpop.f32.mrf.mxu0
    %v195 = vadd.f32 0.0, %v194
    %196 = vdwg.mxu0
    %v198 = vrot.slane %v195, 6
    %v200 = vadd.f32 %v110, %v198
    %v201 = vmul.f32 %v200, 0.5
    %v202 = vtanh.pop %v201
    %v203 = vmul.f32 %v202, 0.5
    %v204 = vadd.f32 %v203, 0.5
    %v205 = vtanh.pop %v200
    %v207 = vrot.slane %v165, 6
    %v209 = vmul.f32 %v204, %v207
    %211 = vrot.lane.b32.xlu0 %v205, 64
    %v212 = vpop.permute.xlu0 %211
    %v214 = vmul.f32 %v204, %v212
    %216 = vrot.lane.b32.xlu0 %v214, 32
    %v217 = vpop.permute.xlu0 %216
    %v219 = vadd.f32 %v209, %v217
    %v220 = vtanh.pop %v219
    %222 = vrot.lane.b32.xlu0 %v220, 64
    %v223 = vpop.permute.xlu0 %222
    %v225 = vmul.f32 %v204, %v223
    %v227 = vrot.slane %v225, 2
    %228 = vrot.lane.b32.xlu0 %v227, 32
    %v229 = vpop.permute.xlu0 %228
    %v230 = vsel %vm121, %v229, 0
    %232 = vmatpush.msra.mxu0 0.0
    %233 = vmatpush.msra.mxu0 0.0
    %234 = vmatpush.msra.mxu0 0.0
    %235 = vmatpush.msra.mxu0 0.0
    %236 = vmatpush.msra.mxu0 0.0
    %237 = vmatpush.msra.mxu0 0.0
    %238 = vmatpush.msra.mxu0 0.0
    %239 = vmatpush.msra.mxu0 0.0
    %240 = vmatpush.msra.mxu0 0.0
    %241 = vmatpush.msra.mxu0 0.0
    %242 = vmatpush.msra.mxu0 0.0
    %243 = vmatpush.msra.mxu0 0.0
    %244 = vmatpush.msra.mxu0 %v118
    %245 = vmatpush.msra.mxu0 %v117
    %246 = vmatpush.msra.mxu0 %v116
    %247 = vmatpush.msra.mxu0 %v115
    %248 = vmatmul.f32.gmra.mxu0 %v230
    %v249 = vpop.f32.mrf.mxu0
    %v250 = vadd.f32 0.0, %v249
    %251 = vdwg.mxu0
    %v253 = vrot.slane %v250, 4
    %v255 = vadd.f32 %v110, %v253
    %v256 = vmul.f32 %v255, 0.5
    %v257 = vtanh.pop %v256
    %v258 = vmul.f32 %v257, 0.5
    %v259 = vadd.f32 %v258, 0.5
    %v260 = vtanh.pop %v255
    %v262 = vrot.slane %v219, 6
    %v264 = vmul.f32 %v259, %v262
    %266 = vrot.lane.b32.xlu0 %v260, 64
    %v267 = vpop.permute.xlu0 %266
    %v269 = vmul.f32 %v259, %v267
    %271 = vrot.lane.b32.xlu0 %v269, 32
    %v272 = vpop.permute.xlu0 %271
    %v274 = vadd.f32 %v264, %v272
    %v275 = vtanh.pop %v274
    %277 = vrot.lane.b32.xlu0 %v275, 64
    %v278 = vpop.permute.xlu0 %277
    %v280 = vmul.f32 %v259, %v278
    %v282 = vrot.slane %v280, 4
    %283 = vrot.lane.b32.xlu0 %v282, 32
    %v284 = vpop.permute.xlu0 %283
    %v285 = vsel %vm121, %v284, 0
    %287 = vmatpush.msra.mxu0 0.0
    %288 = vmatpush.msra.mxu0 0.0
    %289 = vmatpush.msra.mxu0 0.0
    %290 = vmatpush.msra.mxu0 0.0
    %291 = vmatpush.msra.mxu0 0.0
    %292 = vmatpush.msra.mxu0 0.0
    %293 = vmatpush.msra.mxu0 0.0
    %294 = vmatpush.msra.mxu0 0.0
    %295 = vmatpush.msra.mxu0 0.0
    %296 = vmatpush.msra.mxu0 0.0
    %297 = vmatpush.msra.mxu0 0.0
    %298 = vmatpush.msra.mxu0 0.0
    %299 = vmatpush.msra.mxu0 %v118
    %300 = vmatpush.msra.mxu0 %v117
    %301 = vmatpush.msra.mxu0 %v116
    %302 = vmatpush.msra.mxu0 %v115
    %303 = vmatmul.f32.gmra.mxu0 %v285
    %v304 = vpop.f32.mrf.mxu0
    %v305 = vadd.f32 0.0, %v304
    %306 = vdwg.mxu0
    %v308 = vrot.slane %v305, 2
    %v310 = vadd.f32 %v110, %v308
    %v311 = vmul.f32 %v310, 0.5
    %v312 = vtanh.pop %v311
    %v313 = vmul.f32 %v312, 0.5
    %v314 = vadd.f32 %v313, 0.5
    %v315 = vtanh.pop %v310
    %v317 = vrot.slane %v274, 6
    %v319 = vmul.f32 %v314, %v317
    %321 = vrot.lane.b32.xlu0 %v315, 64
    %v322 = vpop.permute.xlu0 %321
    %v324 = vmul.f32 %v314, %v322
    %326 = vrot.lane.b32.xlu0 %v324, 32
    %v327 = vpop.permute.xlu0 %326
    %v329 = vadd.f32 %v319, %v327
    %v330 = vtanh.pop %v329
    %332 = vrot.lane.b32.xlu0 %v330, 64
    %v333 = vpop.permute.xlu0 %332
    %v335 = vmul.f32 %v314, %v333
    %v337 = vrot.slane %v335, 6
    %338 = vrot.lane.b32.xlu0 %v337, 32
    %v339 = vpop.permute.xlu0 %338
    %v340 = vsel %vm121, %v339, 0
    %342 = vmatpush.msra.mxu0 0.0
    %343 = vmatpush.msra.mxu0 0.0
    %344 = vmatpush.msra.mxu0 0.0
    %345 = vmatpush.msra.mxu0 0.0
    %346 = vmatpush.msra.mxu0 0.0
    %347 = vmatpush.msra.mxu0 0.0
    %348 = vmatpush.msra.mxu0 0.0
    %349 = vmatpush.msra.mxu0 0.0
    %350 = vmatpush.msra.mxu0 0.0
    %351 = vmatpush.msra.mxu0 0.0
    %352 = vmatpush.msra.mxu0 0.0
    %353 = vmatpush.msra.mxu0 0.0
    %354 = vmatpush.msra.mxu0 %v118
    %355 = vmatpush.msra.mxu0 %v117
    %356 = vmatpush.msra.mxu0 %v116
    %357 = vmatpush.msra.mxu0 %v115
    %358 = vmatmul.f32.gmra.mxu0 %v340
    %v359 = vpop.f32.mrf.mxu0
    %v360 = vadd.f32 0.0, %v359
    %361 = vdwg.mxu0
    %v362 = vadd.f32 %v113, %v360
    %v363 = vmul.f32 %v362, 0.5
    %v364 = vtanh.pop %v363
    %v365 = vmul.f32 %v364, 0.5
    %v366 = vadd.f32 %v365, 0.5
    %v367 = vtanh.pop %v362
    %v369 = vrot.slane %v329, 6
    %v371 = vmul.f32 %v366, %v369
    %373 = vrot.lane.b32.xlu0 %v367, 64
    %v374 = vpop.permute.xlu0 %373
    %v376 = vmul.f32 %v366, %v374
    %378 = vrot.lane.b32.xlu0 %v376, 32
    %v379 = vpop.permute.xlu0 %378
    %v381 = vadd.f32 %v371, %v379
    %v382 = vtanh.pop %v381
    %384 = vrot.lane.b32.xlu0 %v382, 64
    %v385 = vpop.permute.xlu0 %384
    %v387 = vmul.f32 %v366, %v385
    %389 = vrot.lane.b32.xlu0 %v387, 32
    %v390 = vpop.permute.xlu0 %389
    %v391 = vsel %vm121, %v390, 0
    %393 = vmatpush.msra.mxu0 0.0
    %394 = vmatpush.msra.mxu0 0.0
    %395 = vmatpush.msra.mxu0 0.0
    %396 = vmatpush.msra.mxu0 0.0
    %397 = vmatpush.msra.mxu0 0.0
    %398 = vmatpush.msra.mxu0 0.0
    %399 = vmatpush.msra.mxu0 0.0
    %400 = vmatpush.msra.mxu0 0.0
    %401 = vmatpush.msra.mxu0 0.0
    %402 = vmatpush.msra.mxu0 0.0
    %403 = vmatpush.msra.mxu0 0.0
    %404 = vmatpush.msra.mxu0 0.0
    %405 = vmatpush.msra.mxu0 %v118
    %406 = vmatpush.msra.mxu0 %v117
    %407 = vmatpush.msra.mxu0 %v116
    %408 = vmatpush.msra.mxu0 %v115
    %409 = vmatmul.f32.gmra.mxu0 %v391
    %v410 = vpop.f32.mrf.mxu0
    %v411 = vadd.f32 0.0, %v410
    %412 = vdwg.mxu0
    %v414 = vrot.slane %v411, 6
    %v416 = vadd.f32 %v113, %v414
    %v417 = vmul.f32 %v416, 0.5
    %v418 = vtanh.pop %v417
    %v419 = vmul.f32 %v418, 0.5
    %v420 = vadd.f32 %v419, 0.5
    %v421 = vtanh.pop %v416
    %v423 = vrot.slane %v381, 6
    %v425 = vmul.f32 %v420, %v423
    %427 = vrot.lane.b32.xlu0 %v421, 64
    %v428 = vpop.permute.xlu0 %427
    %v430 = vmul.f32 %v420, %v428
    %432 = vrot.lane.b32.xlu0 %v430, 32
    %v433 = vpop.permute.xlu0 %432
    %v435 = vadd.f32 %v425, %v433
    %v436 = vtanh.pop %v435
    %438 = vrot.lane.b32.xlu0 %v436, 64
    %v439 = vpop.permute.xlu0 %438
    %v441 = vmul.f32 %v420, %v439
    %v443 = vrot.slane %v441, 2
    %444 = vrot.lane.b32.xlu0 %v443, 32
    %v445 = vpop.permute.xlu0 %444
    %v446 = vsel %vm121, %v445, 0
    %448 = vmatpush.msra.mxu0 0.0
    %449 = vmatpush.msra.mxu0 0.0
    %450 = vmatpush.msra.mxu0 0.0
    %451 = vmatpush.msra.mxu0 0.0
    %452 = vmatpush.msra.mxu0 0.0
    %453 = vmatpush.msra.mxu0 0.0
    %454 = vmatpush.msra.mxu0 0.0
    %455 = vmatpush.msra.mxu0 0.0
    %456 = vmatpush.msra.mxu0 0.0
    %457 = vmatpush.msra.mxu0 0.0
    %458 = vmatpush.msra.mxu0 0.0
    %459 = vmatpush.msra.mxu0 0.0
    %460 = vmatpush.msra.mxu0 %v118
    %461 = vmatpush.msra.mxu0 %v117
    %462 = vmatpush.msra.mxu0 %v116
    %463 = vmatpush.msra.mxu0 %v115
    %464 = vmatmul.f32.gmra.mxu0 %v446
    %v465 = vpop.f32.mrf.mxu0
    %v466 = vadd.f32 0.0, %v465
    %467 = vdwg.mxu0
    %v469 = vrot.slane %v466, 4
    %v471 = vadd.f32 %v113, %v469
    %v472 = vmul.f32 %v471, 0.5
    %v473 = vtanh.pop %v472
    %v474 = vmul.f32 %v473, 0.5
    %v475 = vadd.f32 %v474, 0.5
    %v476 = vtanh.pop %v471
    %v478 = vrot.slane %v435, 6
    %v480 = vmul.f32 %v475, %v478
    %482 = vrot.lane.b32.xlu0 %v476, 64
    %v483 = vpop.permute.xlu0 %482
    %v485 = vmul.f32 %v475, %v483
    %487 = vrot.lane.b32.xlu0 %v485, 32
    %v488 = vpop.permute.xlu0 %487
    %v490 = vadd.f32 %v480, %v488
    %v491 = vtanh.pop %v490
    %493 = vrot.lane.b32.xlu0 %v491, 64
    %v494 = vpop.permute.xlu0 %493
    %v496 = vmul.f32 %v475, %v494
    %v498 = vrot.slane %v496, 4
    %499 = vrot.lane.b32.xlu0 %v498, 32
    %v500 = vpop.permute.xlu0 %499
    %v501 = vsel %vm121, %v500, 0
    %503 = vmatpush.msra.mxu0 0.0
    %504 = vmatpush.msra.mxu0 0.0
    %505 = vmatpush.msra.mxu0 0.0
    %506 = vmatpush.msra.mxu0 0.0
    %507 = vmatpush.msra.mxu0 0.0
    %508 = vmatpush.msra.mxu0 0.0
    %509 = vmatpush.msra.mxu0 0.0
    %510 = vmatpush.msra.mxu0 0.0
    %511 = vmatpush.msra.mxu0 0.0
    %512 = vmatpush.msra.mxu0 0.0
    %513 = vmatpush.msra.mxu0 0.0
    %514 = vmatpush.msra.mxu0 0.0
    %515 = vmatpush.msra.mxu0 %v118
    %516 = vmatpush.msra.mxu0 %v117
    %517 = vmatpush.msra.mxu0 %v116
    %518 = vmatpush.msra.mxu0 %v115
    %519 = vmatmul.f32.gmra.mxu0 %v501
    %v520 = vpop.f32.mrf.mxu0
    %v521 = vadd.f32 0.0, %v520
    %522 = vdwg.mxu0
    %v524 = vrot.slane %v521, 2
    %v526 = vadd.f32 %v113, %v524
    %v527 = vmul.f32 %v526, 0.5
    %v528 = vtanh.pop %v527
    %v529 = vmul.f32 %v528, 0.5
    %v530 = vadd.f32 %v529, 0.5
    %v531 = vtanh.pop %v526
    %v533 = vrot.slane %v490, 6
    %v535 = vmul.f32 %v530, %v533
    %537 = vrot.lane.b32.xlu0 %v531, 64
    %v538 = vpop.permute.xlu0 %537
    %v540 = vmul.f32 %v530, %v538
    %542 = vrot.lane.b32.xlu0 %v540, 32
    %v543 = vpop.permute.xlu0 %542
    %v545 = vadd.f32 %v535, %v543
    %v546 = vtanh.pop %v545
    %548 = vrot.lane.b32.xlu0 %v546, 64
    %v549 = vpop.permute.xlu0 %548
    %v551 = vmul.f32 %v530, %v549
    %553 = vrot.lane.b32.xlu0 %v551, 32
    %v554 = vpop.permute.xlu0 %553
    %vm556 = vcmask 261126
    %557 = vst.msk [vmem:[#allocation9 - $0x6] sm:$0xc0] %vm556, %v554
    %559 = vrot.lane.b32.xlu0 %v545, 96
    %v560 = vpop.permute.xlu0 %559
    %562 = vst.msk [vmem:[#allocation11 - $0x6] sm:$0xc0] %vm556, %v560
    %v563 = vld [vmem:[%s4] sm:$0xff]
    %v564 = vld [vmem:[%s4 + $0x8] sm:$0xff]
    %v565 = vld [vmem:[%s4 + $0x10] sm:$0xff]
    %v566 = vld [vmem:[%s4 + $0x18] sm:$0xff]
    %v567 = vld [vmem:[%s5] sm:$0x1]
    %v569 = vperm.slane %v567, 0
    %v571 = vrot.slane %v551, 6
    %572 = vrot.lane.b32.xlu0 %v571, 32
    %v573 = vpop.permute.xlu0 %572
    %v574 = vsel %vm121, %v573, 0
    %576 = vmatpush.msra.mxu0 0.0
    %577 = vmatpush.msra.mxu0 0.0
    %578 = vmatpush.msra.mxu0 0.0
    %579 = vmatpush.msra.mxu0 0.0
    %580 = vmatpush.msra.mxu0 0.0
    %581 = vmatpush.msra.mxu0 0.0
    %582 = vmatpush.msra.mxu0 0.0
    %583 = vmatpush.msra.mxu0 0.0
    %584 = vmatpush.msra.mxu0 0.0
    %585 = vmatpush.msra.mxu0 0.0
    %586 = vmatpush.msra.mxu0 0.0
    %587 = vmatpush.msra.mxu0 0.0
    %588 = vmatpush.msra.mxu0 %v566
    %589 = vmatpush.msra.mxu0 %v565
    %590 = vmatpush.msra.mxu0 %v564
    %591 = vmatpush.msra.mxu0 %v563
    %592 = vmatmul.f32.gmra.mxu0 %v574
    %v593 = vpop.f32.mrf.mxu0
    %v594 = vadd.f32 %v569, %v593
    %595 = vdwg.mxu0
    %vm596 = vcmask 9216
    %v597 = vsel %vm596, %v594, -inf
    %598 = vmax.xlane.f32.xlu0 %v597
    %v599 = vpop.xlane.xlu0 %598
    %v600 = vsub.f32 %v594, %v599
    %v601 = vmul.f32 %v600, 1.442695
    %v602 = vpow.pop %v601
    %v603 = vsel %vm596, %v602, 0.0
    %604 = vadd.xlane.f32.xlu0 %v603
    %v605 = vpop.xlane.xlu0 %604
    %v606 = vlog2.pop %v605
    %v607 = vmul.f32 %v606, 0.6931472
    %v608 = vsub.f32 %v600, %v607
    %609 = vst.msk [vmem:[#allocation8] sm:$0x3] %vm596, %v608
    // Predicated region
    $region46: #{decoder_lstm_forward.1} parent=1 // pred_check
      _
    $region47: #{decoder_lstm_forward.1} parent=1 // pred_check_branch
      %611 = sbr.rel (0) target = $region49
    $region48: #{decoder_lstm_forward.1} parent=1 // pred_region
      %613 = vsyncadd [#allocation4], 0
      %s615 = sshll.u32 [#allocation8], 4
      %s616 = int_to_ptr.vmem [resolvable:$true] %s615
      %s617 = sshll.u32 %s8, 4
      %s618 = int_to_ptr.hbm [resolvable:$true] %s617
      %620 = dma.vmem_to_hbm [thread:$0]  %s616, 32, %s618, [#allocation4]
    $region49: #{decoder_lstm_forward.1} parent=1 // pred_fallthru
      _
    // Predicated region
    $region50: #{decoder_lstm_forward.1} parent=1 // pred_check
      _
    $region51: #{decoder_lstm_forward.1} parent=1 // pred_check_branch
      %622 = sbr.rel (0) target = $region53
    $region52: #{decoder_lstm_forward.1} parent=1 // pred_region
      %624 = vsyncadd [#allocation10], 0
      %s626 = sshll.u32 [#allocation9], 4
      %s627 = int_to_ptr.vmem [resolvable:$true] %s626
      %s628 = sshll.u32 %s9, 4
      %s629 = int_to_ptr.hbm [resolvable:$true] %s628
      %631 = dma.vmem_to_hbm [thread:$0]  %s627, 32, %s629, [#allocation10]
    $region53: #{decoder_lstm_forward.1} parent=1 // pred_fallthru
      _
    // Predicated region
    $region54: #{decoder_lstm_forward.1} parent=1 // pred_check
      _
    $region55: #{decoder_lstm_forward.1} parent=1 // pred_check_branch
      %633 = sbr.rel (0) target = $region57
    $region56: #{decoder_lstm_forward.1} parent=1 // pred_region
      %635 = vsyncadd [#allocation10], 0
      %s637 = sshll.u32 [#allocation11], 4
      %s638 = int_to_ptr.vmem [resolvable:$true] %s637
      %s639 = sshll.u32 %s10, 4
      %s640 = int_to_ptr.hbm [resolvable:$true] %s639
      %642 = dma.vmem_to_hbm [thread:$0]  %s638, 32, %s640, [#allocation10]
    $region57: #{decoder_lstm_forward.1} parent=1 // pred_fallthru
      _
    // Predicated region
    $region58: #{decoder_lstm_forward.1} parent=1 // pred_check
      _
    $region59: #{decoder_lstm_forward.1} parent=1 // pred_check_branch
      %644 = sbr.rel (0) target = $region61
    $region60: #{decoder_lstm_forward.1} parent=1 // pred_region
      %646 = dma.done [#allocation4], 32
    $region61: #{decoder_lstm_forward.1} parent=1 // pred_fallthru
      _
    // Predicated region
    $region62: #{decoder_lstm_forward.1} parent=1 // pred_check
      _
    $region63: #{decoder_lstm_forward.1} parent=1 // pred_check_branch
      %648 = sbr.rel (0) target = $region65
    $region64: #{decoder_lstm_forward.1} parent=1 // pred_region
      %650 = dma.done [#allocation10], 32
    $region65: #{decoder_lstm_forward.1} parent=1 // pred_fallthru
      _
    // Predicated region
    $region66: #{decoder_lstm_forward.1} parent=1 // pred_check
      _
    $region67: #{decoder_lstm_forward.1} parent=1 // pred_check_branch
      %652 = sbr.rel (0) target = $region69
    $region68: #{decoder_lstm_forward.1} parent=1 // pred_region
      %654 = dma.done [#allocation10], 32
    $region69: #{decoder_lstm_forward.1} parent=1 // pred_fallthru
      _
    %655 = vsyncpa [#allocation3], 1
    %656 = vsyncpa [#allocation6], 1
    %657 = vsyncpa [#allocation4], 1
    %658 = vsyncpa [#allocation10], 1

</llo_original>
